<compile_context>
chip_gen: v7x
topology: tpu7x:2x2x1
jax: 0.10.0
libtpu: 0.0.40
codegen_flags: <defaults>
</compile_context>

<pallas_src>
import math

import jax
import jax.numpy as jnp
from jax.experimental import pallas as pl
from jax.experimental.pallas import tpu as pltpu


def _round_up(x: int, m: int) -> int:
    return ((x + m - 1) // m) * m


def _sublane_granule(dtype) -> int:
    # 8 for f32, 16 for bf16, 32 for int8/fp8: sub-32-bit dtypes pack along sublanes.
    return max(8, 32 // jnp.dtype(dtype).itemsize)


def _tpu_generation_config():
    """Returns (tb_cap, vmem_limit_bytes, tensorcores_per_chip)."""
    kind = ""
    try:
        kind = jax.devices()[0].device_kind.lower()
    except Exception:  # pragma: no cover
        pass
    if "v7" in kind:
        # 64 MiB VMEM per TensorCore, 2 TensorCores per chip.
        return 256, 56 * 1024 * 1024, 2
    if "v5" in kind or "v6" in kind:
        # 128 MiB VMEM, 1 TensorCore: bigger tiles + higher scoped limit.
        return 512, 96 * 1024 * 1024, 1
    # Unknown generation: conservative (safe on every current part).
    return 256, 48 * 1024 * 1024, 1


def _make_random_layer_kernel(num_inputs: int, scale_inv: float):
    """Kernel over one batch tile: fused matmuls + elementwise product."""

    def kernel(*refs):
        x_refs = refs[:num_inputs]                      # each (TB, K_i_pad), compute dtype
        r_refs = refs[num_inputs:2 * num_inputs]        # each (K_i_pad, N_pad), compute dtype
        o_ref = refs[2 * num_inputs]                    # (TB, N_pad)

        # First matmul carries the 1/output_dim**(1/N) scale (same order as PyTorch:
        # return_list[0] is scaled before the elementwise products).  MXU accumulates
        # in f32 regardless of the (bf16) operand dtype.
        acc = jnp.dot(x_refs[0][...], r_refs[0][...],
                      preferred_element_type=jnp.float32) * jnp.float32(scale_inv)
        for i in range(1, num_inputs):
            acc = acc * jnp.dot(x_refs[i][...], r_refs[i][...],
                                preferred_element_type=jnp.float32)
        o_ref[...] = acc.astype(o_ref.dtype)

    return kernel


def random_layer_forward(input_list, random_matrices, *, tb=None,
                         compute_dtype=jnp.bfloat16, out_dtype=jnp.float32):
    """Forward pass of RandomLayer.

    input_list[i]:      (B, K_i)
    random_matrices[i]: (K_i, output_dim)
    returns:            (B, output_dim) in out_dtype (default float32)
    """
    num_inputs = len(input_list)
    assert num_inputs >= 1 and num_inputs == len(random_matrices)
    B = input_list[0].shape[0]
    output_dim = random_matrices[0].shape[1]
    for x, r in zip(input_list, random_matrices):
        assert x.shape[0] == B
        assert x.shape[1] == r.shape[0]
        assert r.shape[1] == output_dim

    tb_cap, vmem_limit, num_tc = _tpu_generation_config()
    granule = _sublane_granule(compute_dtype)

    # Lane-dense output: pad N to a multiple of 128 (padded matrix columns are zero,
    # so padded output columns are exactly zero and are sliced off below).  Pad K_i
    # too so both the activation lane dim and the matrix sublane dim are dense.
    n_pad = _round_up(output_dim, 128)
    k_pads = [_round_up(x.shape[1], 128) for x in input_list]

    # Batch tile: big enough to amortize per-step overhead, small enough for VMEM;
    # on 2-TC chips split into at least two tiles so "parallel" can use both cores.
    if tb is None:
        if B >= tb_cap:
            tb = tb_cap
        elif num_tc >= 2 and B >= 2 * granule:
            tb = _round_up((B + 1) // 2, granule)
        else:
            tb = _round_up(B, granule)
    b_pad = _round_up(B, tb)

    # Cast to the (bf16) compute dtype in the wrapper: halves HBM weight traffic and
    # resident VMEM, enables the native 2x bf16 MXU rate.  Zero padding is exact.
    xs = [jnp.pad(x.astype(compute_dtype), ((0, b_pad - B), (0, kp - x.shape[1])))
          for x, kp in zip(input_list, k_pads)]
    rs = [jnp.pad(r.astype(compute_dtype), ((0, kp - r.shape[0]), (0, n_pad - output_dim)))
          for r, kp in zip(random_matrices, k_pads)]

    scale_inv = 1.0 / math.pow(float(output_dim), 1.0 / num_inputs)
    kernel = _make_random_layer_kernel(num_inputs, scale_inv)

    def build_and_run(weight_buffer_count):
        weight_kwargs = ({} if weight_buffer_count is None
                         else dict(pipeline_mode=pl.Buffered(weight_buffer_count)))
        in_specs = (
            # Activations: tiled over the batch grid axis (auto-pipelined).
            [pl.BlockSpec((tb, x.shape[1]), lambda b: (b, 0)) for x in xs]
            # Random matrices: grid-invariant (constant block index -> fetched once);
            # Buffered(1) drops their useless second pipeline buffer.
            + [pl.BlockSpec((r.shape[0], n_pad), lambda b: (0, 0), **weight_kwargs)
               for r in rs]
        )
        out_spec = pl.BlockSpec((tb, n_pad), lambda b: (b, 0))
        call = pl.pallas_call(
            kernel,
            out_shape=jax.ShapeDtypeStruct((b_pad, n_pad), out_dtype),
            grid_spec=pltpu.PrefetchScalarGridSpec(
                num_scalar_prefetch=0,
                grid=(b_pad // tb,),
                in_specs=in_specs,
                out_specs=out_spec,
            ),
            compiler_params=pltpu.CompilerParams(
                dimension_semantics=("parallel",),      # megacore-shardable on v7x
                vmem_limit_bytes=vmem_limit,            # per-generation scoped limit
            ),
        )
        return jax.block_until_ready(call(*xs, *rs))

    try:
        out = build_and_run(1)          # single-buffer the grid-invariant weights
    except Exception:
        # Fallback for JAX versions where BlockSpec pipeline_mode / Buffered(1) is
        # not supported for top-level pallas_call pipelining.
        out = build_and_run(None)

    return out[:B, :output_dim]


if __name__ == "__main__":
    # Small shapes consistent with the module's typical CDAN use:
    # two inputs (feature, class-probabilities), output_dim scaled down.
    B = 6
    input_dim_list = [32, 16]
    output_dim = 64          # deliberately < 128 to exercise the lane-padding path

    key = jax.random.PRNGKey(0)
    keys = jax.random.split(key, 2 * len(input_dim_list))
    input_list = [
        jax.random.normal(keys[i], (B, input_dim_list[i]), jnp.float32)
        for i in range(len(input_dim_list))
    ]
    # torch.randn(input_dim, output_dim) equivalents.
    random_matrices = [
        jax.random.normal(keys[len(input_dim_list) + i],
                          (input_dim_list[i], output_dim), jnp.float32)
        for i in range(len(input_dim_list))
    ]

    out = random_layer_forward(input_list, random_matrices)
    out = jax.block_until_ready(out)
    assert out.shape == (B, output_dim)
    assert out.dtype == jnp.float32

    # Pure-JAX reference mirroring the PyTorch forward, evaluated on the same
    # bf16-rounded operands the kernel consumes (f32 math), so the only remaining
    # difference is MXU summation order.
    xs_ref = [x.astype(jnp.bfloat16).astype(jnp.float32) for x in input_list]
    rs_ref = [r.astype(jnp.bfloat16).astype(jnp.float32) for r in random_matrices]
    return_list = [x @ r for x, r in zip(xs_ref, rs_ref)]
    ref = return_list[0] / math.pow(float(output_dim), 1.0 / len(return_list))
    for single in return_list[1:]:
        ref = ref * single
    assert jnp.allclose(out, ref, atol=1e-3, rtol=1e-3), (
        float(jnp.max(jnp.abs(out - ref))))

    # Single-input degenerate case (out = x @ R / output_dim).
    out1 = random_layer_forward(input_list[:1], random_matrices[:1])
    out1 = jax.block_until_ready(out1)
    ref1 = (xs_ref[0] @ rs_ref[0]) / float(output_dim)
    assert jnp.allclose(out1, ref1, atol=1e-3, rtol=1e-3)

    # Full-precision compute path still works and matches the exact f32 reference.
    out_f32 = random_layer_forward(input_list, random_matrices,
                                   compute_dtype=jnp.float32)
    out_f32 = jax.block_until_ready(out_f32)
    ret_f32 = [x @ r for x, r in zip(input_list, random_matrices)]
    ref_f32 = ret_f32[0] / math.pow(float(output_dim), 1.0 / len(ret_f32))
    for single in ret_f32[1:]:
        ref_f32 = ref_f32 * single
    assert jnp.allclose(out_f32, ref_f32, atol=1e-4, rtol=1e-4)

    print("KERNEL_OK")
</pallas_src>

<mosaic_0001>
module attributes {stable_mosaic.version = 11 : i64} {
  func.func @kernel(%arg0: i32, %arg1: memref<16x128xbf16, #tpu.memory_space<vmem>>, %arg2: memref<16x128xbf16, #tpu.memory_space<vmem>>, %arg3: memref<128x128xbf16, #tpu.memory_space<vmem>>, %arg4: memref<128x128xbf16, #tpu.memory_space<vmem>>, %arg5: memref<16x128xf32, #tpu.memory_space<vmem>>) attributes {dimension_semantics = [#tpu.dimension_semantics<parallel>], iteration_bounds = array<i64: 1>, scalar_prefetch = 0 : i64, scratch_operands = 0 : i64, tpu.core_type = #tpu.core_type<tc>, window_params = [{transform_indices = @transform_0, window_bounds = array<i64: 16, 128>}, {transform_indices = @transform_1, window_bounds = array<i64: 16, 128>}, {pipeline_mode = #tpu.pipeline_mode<synchronous>, transform_indices = @transform_2, window_bounds = array<i64: 128, 128>}, {pipeline_mode = #tpu.pipeline_mode<synchronous>, transform_indices = @transform_3, window_bounds = array<i64: 128, 128>}, {transform_indices = @transform_4, window_bounds = array<i64: 16, 128>}]} {
    %c0 = arith.constant 0 : index
    %c0_0 = arith.constant 0 : index
    %0 = vector.load %arg1[%c0, %c0_0] : memref<16x128xbf16, #tpu.memory_space<vmem>>, vector<16x128xbf16>
    %c0_1 = arith.constant 0 : index
    %c0_2 = arith.constant 0 : index
    %1 = vector.load %arg3[%c0_1, %c0_2] : memref<128x128xbf16, #tpu.memory_space<vmem>>, vector<128x128xbf16>
    %cst = arith.constant dense<0.000000e+00> : vector<16x128xf32>
    %2 = tpu.matmul %0, %1, %cst {dimension_numbers = #tpu.dot_dimension_numbers<[1], [0], [0], [1], [0, 0, 1, 1], [], []>} : vector<16x128xbf16>, vector<128x128xbf16>, vector<16x128xf32> -> vector<16x128xf32>
    %cst_3 = arith.constant 1.250000e-01 : f32
    %3 = vector.broadcast %cst_3 : f32 to vector<16x128xf32>
    %4 = arith.mulf %2, %3 : vector<16x128xf32>
    %c0_4 = arith.constant 0 : index
    %c0_5 = arith.constant 0 : index
    %5 = vector.load %arg2[%c0_4, %c0_5] : memref<16x128xbf16, #tpu.memory_space<vmem>>, vector<16x128xbf16>
    %c0_6 = arith.constant 0 : index
    %c0_7 = arith.constant 0 : index
    %6 = vector.load %arg4[%c0_6, %c0_7] : memref<128x128xbf16, #tpu.memory_space<vmem>>, vector<128x128xbf16>
    %cst_8 = arith.constant dense<0.000000e+00> : vector<16x128xf32>
    %7 = tpu.matmul %5, %6, %cst_8 {dimension_numbers = #tpu.dot_dimension_numbers<[1], [0], [0], [1], [0, 0, 1, 1], [], []>} : vector<16x128xbf16>, vector<128x128xbf16>, vector<16x128xf32> -> vector<16x128xf32>
    %8 = arith.mulf %4, %7 : vector<16x128xf32>
    %c0_9 = arith.constant 0 : index
    %c0_10 = arith.constant 0 : index
    %9 = vector.load %arg5[%c0_9, %c0_10] : memref<16x128xf32, #tpu.memory_space<vmem>>, vector<16x128xf32>
    tpu.vector_store %arg5[%c0_9, %c0_10], %8 {strides = array<i32>} : memref<16x128xf32, #tpu.memory_space<vmem>>, vector<16x128xf32>,
    return
  }
  func.func @transform_0(%arg0: i32) -> (i32, i32) {
    %c0_i32 = arith.constant 0 : i32
    %c0_i32_0 = arith.constant 0 : i32
    return %arg0, %c0_i32 : i32, i32
  }
  func.func @transform_1(%arg0: i32) -> (i32, i32) {
    %c0_i32 = arith.constant 0 : i32
    %c0_i32_0 = arith.constant 0 : i32
    return %arg0, %c0_i32 : i32, i32
  }
  func.func @transform_2(%arg0: i32) -> (i32, i32) {
    %c0_i32 = arith.constant 0 : i32
    %c0_i32_0 = arith.constant 0 : i32
    %c0_i32_1 = arith.constant 0 : i32
    return %c0_i32, %c0_i32_0 : i32, i32
  }
  func.func @transform_3(%arg0: i32) -> (i32, i32) {
    %c0_i32 = arith.constant 0 : i32
    %c0_i32_0 = arith.constant 0 : i32
    %c0_i32_1 = arith.constant 0 : i32
    return %c0_i32, %c0_i32_0 : i32, i32
  }
  func.func @transform_4(%arg0: i32) -> (i32, i32) {
    %c0_i32 = arith.constant 0 : i32
    %c0_i32_0 = arith.constant 0 : i32
    return %arg0, %c0_i32 : i32, i32
  }
}

module attributes {stable_mosaic.version = 11 : i64} {
  func.func @kernel(%arg0: i32, %arg1: memref<16x128xbf16, #tpu.memory_space<vmem>>, %arg2: memref<16x128xbf16, #tpu.memory_space<vmem>>, %arg3: memref<128x128xbf16, #tpu.memory_space<vmem>>, %arg4: memref<128x128xbf16, #tpu.memory_space<vmem>>, %arg5: memref<16x128xf32, #tpu.memory_space<vmem>>) attributes {dimension_semantics = [#tpu.dimension_semantics<parallel>], iteration_bounds = array<i64: 1>, scalar_prefetch = 0 : i64, scratch_operands = 0 : i64, tpu.core_type = #tpu.core_type<tc>, window_params = [{transform_indices = @transform_0, window_bounds = array<i64: 16, 128>}, {transform_indices = @transform_1, window_bounds = array<i64: 16, 128>}, {pipeline_mode = #tpu.pipeline_mode<synchronous>, transform_indices = @transform_2, window_bounds = array<i64: 128, 128>}, {pipeline_mode = #tpu.pipeline_mode<synchronous>, transform_indices = @transform_3, window_bounds = array<i64: 128, 128>}, {transform_indices = @transform_4, window_bounds = array<i64: 16, 128>}]} {
    %c0 = arith.constant 0 : index
    %c0_0 = arith.constant 0 : index
    %0 = vector.load %arg1[%c0, %c0_0] : memref<16x128xbf16, #tpu.memory_space<vmem>>, vector<16x128xbf16>
    %c0_1 = arith.constant 0 : index
    %c0_2 = arith.constant 0 : index
    %1 = vector.load %arg3[%c0_1, %c0_2] : memref<128x128xbf16, #tpu.memory_space<vmem>>, vector<128x128xbf16>
    %cst = arith.constant dense<0.000000e+00> : vector<16x128xf32>
    %2 = tpu.matmul %0, %1, %cst {dimension_numbers = #tpu.dot_dimension_numbers<[1], [0], [0], [1], [0, 0, 1, 1], [], []>} : vector<16x128xbf16>, vector<128x128xbf16>, vector<16x128xf32> -> vector<16x128xf32>
    %cst_3 = arith.constant 1.250000e-01 : f32
    %3 = vector.broadcast %cst_3 : f32 to vector<16x128xf32>
    %4 = arith.mulf %2, %3 : vector<16x128xf32>
    %c0_4 = arith.constant 0 : index
    %c0_5 = arith.constant 0 : index
    %5 = vector.load %arg2[%c0_4, %c0_5] : memref<16x128xbf16, #tpu.memory_space<vmem>>, vector<16x128xbf16>
    %c0_6 = arith.constant 0 : index
    %c0_7 = arith.constant 0 : index
    %6 = vector.load %arg4[%c0_6, %c0_7] : memref<128x128xbf16, #tpu.memory_space<vmem>>, vector<128x128xbf16>
    %cst_8 = arith.constant dense<0.000000e+00> : vector<16x128xf32>
    %7 = tpu.matmul %5, %6, %cst_8 {dimension_numbers = #tpu.dot_dimension_numbers<[1], [0], [0], [1], [0, 0, 1, 1], [], []>} : vector<16x128xbf16>, vector<128x128xbf16>, vector<16x128xf32> -> vector<16x128xf32>
    %8 = arith.mulf %4, %7 : vector<16x128xf32>
    %c0_9 = arith.constant 0 : index
    %c0_10 = arith.constant 0 : index
    %9 = vector.load %arg5[%c0_9, %c0_10] : memref<16x128xf32, #tpu.memory_space<vmem>>, vector<16x128xf32>
    tpu.vector_store %arg5[%c0_9, %c0_10], %8 {strides = array<i32>} : memref<16x128xf32, #tpu.memory_space<vmem>>, vector<16x128xf32>,
    return
  }
  func.func @transform_0(%arg0: i32) -> (i32, i32) {
    %c0_i32 = arith.constant 0 : i32
    %c0_i32_0 = arith.constant 0 : i32
    return %arg0, %c0_i32 : i32, i32
  }
  func.func @transform_1(%arg0: i32) -> (i32, i32) {
    %c0_i32 = arith.constant 0 : i32
    %c0_i32_0 = arith.constant 0 : i32
    return %arg0, %c0_i32 : i32, i32
  }
  func.func @transform_2(%arg0: i32) -> (i32, i32) {
    %c0_i32 = arith.constant 0 : i32
    %c0_i32_0 = arith.constant 0 : i32
    %c0_i32_1 = arith.constant 0 : i32
    return %c0_i32, %c0_i32_0 : i32, i32
  }
  func.func @transform_3(%arg0: i32) -> (i32, i32) {
    %c0_i32 = arith.constant 0 : i32
    %c0_i32_0 = arith.constant 0 : i32
    %c0_i32_1 = arith.constant 0 : i32
    return %c0_i32, %c0_i32_0 : i32, i32
  }
  func.func @transform_4(%arg0: i32) -> (i32, i32) {
    %c0_i32 = arith.constant 0 : i32
    %c0_i32_0 = arith.constant 0 : i32
    return %arg0, %c0_i32 : i32, i32
  }
}

</mosaic_0001>

<llo_original>
// kernel: tpu_custom_call.1
$region0: #{tpu_custom_call.1}
  #allocation0 [shape = 'u32[]', space=smem, size = 0x4, offset = 0x4, fixed_abs, tag = 'smem constant byte address 0x4 - core index']
  #allocation1 [shape = 'u32[144,128]{1,0:T(1,128)}', space=vmem, size = 0x12000, scoped, tag = 'internal scratch']
  %s0 = inlined_call_operand.hbm [shape: bf16[16,128], index: 0, kind: input, shape index: {}]
  %s1 = inlined_call_operand.hbm [shape: bf16[16,128], index: 1, kind: input, shape index: {}]
  %s2 = inlined_call_operand.hbm [shape: bf16[128,128], index: 2, kind: input, shape index: {}]
  %s3 = inlined_call_operand.hbm [shape: bf16[128,128], index: 3, kind: input, shape index: {}]
  %s4 = inlined_call_operand.hbm [shape: f32[16,128], index: 4, kind: output, shape index: {}]
  %s5 = sld [smem:[#allocation0]]
  $region42: #{tpu_custom_call.1} parent=0
    _
  %s7 = ssub.s32 1, %s5
  %s8 = scalar_select 0, %s7, %s5
  $region1: #{tpu_custom_call.1} parent=0
    #allocation2 [shape = 'u8[4096]{0}', space=vmem, size = 0x1000, scoped, tag = 'input window, operand 0, single buffered']
    #allocation3 [shape = 's32[1]{0}', space=sflag, size = 0x4, scoped, tag = 'scoped memory for tpu_custom_call.1']
    #allocation4 [shape = 's32[1]{0}', space=sflag, size = 0x4, scoped, tag = 'scoped memory for tpu_custom_call.1']
    #allocation5 [shape = 'u8[4096]{0}', space=vmem, size = 0x1000, scoped, tag = 'input window, operand 1, single buffered']
    #allocation6 [shape = 's32[1]{0}', space=sflag, size = 0x4, scoped, tag = 'scoped memory for tpu_custom_call.1']
    #allocation7 [shape = 'u8[32768]{0}', space=vmem, size = 0x8000, scoped, tag = 'input window, operand 2, single buffered']
    #allocation8 [shape = 'u8[32768]{0}', space=vmem, size = 0x8000, scoped, tag = 'input window, operand 3, single buffered']
    #allocation9 [shape = 's32[1]{0}', space=sflag, size = 0x4, scoped, tag = 'scoped memory for tpu_custom_call.1']
    #allocation10 [shape = 'u8[8192]{0}', space=vmem, size = 0x2000, scoped, tag = 'output window, operand 0, single buffered']
    %9 = vsyncpa [#allocation3], 0
    %10 = vsyncpa [#allocation6], 0
    %11 = vsyncpa [#allocation9], 0
    %12 = vsyncpa [#allocation4], 0
    // Predicated region
    $region2: #{tpu_custom_call.1} parent=1 // pred_check
      _
    $region3: #{tpu_custom_call.1} parent=1 // pred_check_branch
      %14 = sbr.rel (0) target = $region5
    $region4: #{tpu_custom_call.1} parent=1 // pred_region
      %s16 = ssub.s32 128, 128
      %17 = vsyncadd [#allocation3], %s16
      %s18 = sshll.u32 [#allocation2], 4
      %s19 = int_to_ptr.vmem [resolvable:$true] %s18
      %24 = dma.hbm_to_vmem [thread:$0]  %s0, 128, %s19, [#allocation3], 64, 64, 4
    $region5: #{tpu_custom_call.1} parent=1 // pred_fallthru
      _
    // Predicated region
    $region6: #{tpu_custom_call.1} parent=1 // pred_check
      _
    $region7: #{tpu_custom_call.1} parent=1 // pred_check_branch
      %26 = sbr.rel (0) target = $region9
    $region8: #{tpu_custom_call.1} parent=1 // pred_region
      %s28 = ssub.s32 128, 128
      %29 = vsyncadd [#allocation6], %s28
      %s30 = sshll.u32 [#allocation5], 4
      %s31 = int_to_ptr.vmem [resolvable:$true] %s30
      %36 = dma.hbm_to_vmem [thread:$0]  %s1, 128, %s31, [#allocation6], 64, 64, 4
    $region9: #{tpu_custom_call.1} parent=1 // pred_fallthru
      _
    // Predicated region
    $region10: #{tpu_custom_call.1} parent=1 // pred_check
      _
    $region11: #{tpu_custom_call.1} parent=1 // pred_check_branch
      %38 = sbr.rel (0) target = $region13
    $region12: #{tpu_custom_call.1} parent=1 // pred_region
      %s40 = ssub.s32 1024, 1024
      %41 = vsyncadd [#allocation6], %s40
      %s42 = sshll.u32 [#allocation7], 4
      %s43 = int_to_ptr.vmem [resolvable:$true] %s42
      %48 = dma.hbm_to_vmem [thread:$0]  %s2, 1024, %s43, [#allocation6], 64, 64, 4
    $region13: #{tpu_custom_call.1} parent=1 // pred_fallthru
      _
    // Predicated region
    $region14: #{tpu_custom_call.1} parent=1 // pred_check
      _
    $region15: #{tpu_custom_call.1} parent=1 // pred_check_branch
      %50 = sbr.rel (0) target = $region17
    $region16: #{tpu_custom_call.1} parent=1 // pred_region
      %s52 = ssub.s32 1024, 1024
      %53 = vsyncadd [#allocation9], %s52
      %s54 = sshll.u32 [#allocation8], 4
      %s55 = int_to_ptr.vmem [resolvable:$true] %s54
      %60 = dma.hbm_to_vmem [thread:$0]  %s3, 1024, %s55, [#allocation9], 64, 64, 4
    $region17: #{tpu_custom_call.1} parent=1 // pred_fallthru
      _
    // Predicated region
    $region18: #{tpu_custom_call.1} parent=1 // pred_check
      _
    $region19: #{tpu_custom_call.1} parent=1 // pred_check_branch
      %62 = sbr.rel (0) target = $region21
    $region20: #{tpu_custom_call.1} parent=1 // pred_region
      %63 = dma.done [#allocation3], 128
    $region21: #{tpu_custom_call.1} parent=1 // pred_fallthru
      _
    // Predicated region
    $region22: #{tpu_custom_call.1} parent=1 // pred_check
      _
    $region23: #{tpu_custom_call.1} parent=1 // pred_check_branch
      %65 = sbr.rel (0) target = $region25
    $region24: #{tpu_custom_call.1} parent=1 // pred_region
      %66 = dma.done [#allocation6], 128
    $region25: #{tpu_custom_call.1} parent=1 // pred_fallthru
      _
    // Predicated region
    $region26: #{tpu_custom_call.1} parent=1 // pred_check
      _
    $region27: #{tpu_custom_call.1} parent=1 // pred_check_branch
      %68 = sbr.rel (0) target = $region29
    $region28: #{tpu_custom_call.1} parent=1 // pred_region
      %69 = dma.done [#allocation6], 1024
    $region29: #{tpu_custom_call.1} parent=1 // pred_fallthru
      _
    // Predicated region
    $region30: #{tpu_custom_call.1} parent=1 // pred_check
      _
    $region31: #{tpu_custom_call.1} parent=1 // pred_check_branch
      %71 = sbr.rel (0) target = $region33
    $region32: #{tpu_custom_call.1} parent=1 // pred_region
      %72 = dma.done [#allocation9], 1024
    $region33: #{tpu_custom_call.1} parent=1 // pred_fallthru
      _
    %v74 = vld [vmem:[#allocation2] sm:$0xf]
    %v75 = vld [vmem:[#allocation2 + $0x4] sm:$0xf]
    %v76 = vld [vmem:[#allocation7] sm:$0xf]
    %v77 = vld [vmem:[#allocation7 + $0x4] sm:$0xf]
    %v78 = vld [vmem:[#allocation7 + $0x8] sm:$0xf]
    %v79 = vld [vmem:[#allocation7 + $0xc] sm:$0xf]
    %v80 = vld [vmem:[#allocation7 + $0x10] sm:$0xf]
    %v81 = vld [vmem:[#allocation7 + $0x14] sm:$0xf]
    %v82 = vld [vmem:[#allocation7 + $0x18] sm:$0xf]
    %v83 = vld [vmem:[#allocation7 + $0x1c] sm:$0xf]
    %v84 = vld [vmem:[#allocation7 + $0x20] sm:$0xf]
    %v85 = vld [vmem:[#allocation7 + $0x24] sm:$0xf]
    %v86 = vld [vmem:[#allocation7 + $0x28] sm:$0xf]
    %v87 = vld [vmem:[#allocation7 + $0x2c] sm:$0xf]
    %v88 = vld [vmem:[#allocation7 + $0x30] sm:$0xf]
    %v89 = vld [vmem:[#allocation7 + $0x34] sm:$0xf]
    %v90 = vld [vmem:[#allocation7 + $0x38] sm:$0xf]
    %v91 = vld [vmem:[#allocation7 + $0x3c] sm:$0xf]
    %v94 = vunpack.c.l.b16 %v74
    %v95 = vunpack.c.l.b16 %v75
    %v96 = vpack.c.b16 %v95, %v94
    %v114 = vunpack.c.l.b16 %v76
    %v115 = vunpack.c.l.b16 %v77
    %v116 = vunpack.c.l.b16 %v78
    %v117 = vunpack.c.l.b16 %v79
    %v118 = vunpack.c.l.b16 %v80
    %v119 = vunpack.c.l.b16 %v81
    %v120 = vunpack.c.l.b16 %v82
    %v121 = vunpack.c.l.b16 %v83
    %v122 = vunpack.c.l.b16 %v84
    %v123 = vunpack.c.l.b16 %v85
    %v124 = vunpack.c.l.b16 %v86
    %v125 = vunpack.c.l.b16 %v87
    %v126 = vunpack.c.l.b16 %v88
    %v127 = vunpack.c.l.b16 %v89
    %v128 = vunpack.c.l.b16 %v90
    %v129 = vunpack.c.l.b16 %v91
    %v130 = vpack.c.b16 %v115, %v114
    %v131 = vpack.c.b16 %v117, %v116
    %v132 = vpack.c.b16 %v119, %v118
    %v133 = vpack.c.b16 %v121, %v120
    %v134 = vpack.c.b16 %v123, %v122
    %v135 = vpack.c.b16 %v125, %v124
    %v136 = vpack.c.b16 %v127, %v126
    %v137 = vpack.c.b16 %v129, %v128
    %146 = vmatprep.subr.bf16.mxu0 0
    %147 = vmatpush1.bf16.msra.mxu0 %v130
    %148 = vmatprep.subr.bf16.mxu0 0
    %149 = vmatpush1.bf16.msra.mxu0 %v131
    %150 = vmatprep.subr.bf16.mxu0 0
    %151 = vmatpush1.bf16.msra.mxu0 %v132
    %152 = vmatprep.subr.bf16.mxu0 0
    %153 = vmatpush1.bf16.msra.mxu0 %v133
    %154 = vmatprep.subr.bf16.mxu0 0
    %155 = vmatpush1.bf16.msra.mxu0 %v134
    %156 = vmatprep.subr.bf16.mxu0 0
    %157 = vmatpush1.bf16.msra.mxu0 %v135
    %158 = vmatprep.subr.bf16.mxu0 0
    %159 = vmatpush1.bf16.msra.mxu0 %v136
    %160 = vmatprep.subr.bf16.mxu0 0
    %161 = vmatpush1.bf16.msra.mxu0 %v137
    %162 = vmatprep.subr.bf16.mxu0 0
    %163 = vmatpush1.bf16.msra.mxu0 0
    %164 = vmatprep.subr.bf16.mxu0 0
    %165 = vmatpush1.bf16.msra.mxu0 0
    %166 = vmatprep.subr.bf16.mxu0 0
    %167 = vmatpush1.bf16.msra.mxu0 0
    %168 = vmatprep.subr.bf16.mxu0 0
    %169 = vmatpush1.bf16.msra.mxu0 0
    %170 = vmatprep.subr.bf16.mxu0 0
    %171 = vmatpush1.bf16.msra.mxu0 0
    %172 = vmatprep.subr.bf16.mxu0 0
    %173 = vmatpush1.bf16.msra.mxu0 0
    %174 = vmatprep.subr.bf16.mxu0 0
    %175 = vmatpush1.bf16.msra.mxu0 0
    %176 = vmatprep.subr.bf16.mxu0 0
    %177 = vmatpush1.bf16.msra.mxu0 0
    %178 = vmatprep.mubr.bf16.mxu0 0
    %179 = vmatmul.mubr.bf16.gmra.mrb[0].mxu0 %v96
    %v180 = vpop.f32.mrb[0].mxu0
    %v181 = vadd.f32 0.0, %v180
    %v182 = vpop.f32.mrb[0].mxu0
    %v183 = vpop.f32.mrb[0].mxu0
    %v184 = vadd.f32 0.0, %v183
    %v185 = vpop.f32.mrb[0].mxu0
    %186 = vdwg.mxu0
    %v187 = vmul.f32 %v181, 0.125
    %v188 = vmul.f32 %v184, 0.125
    %v189 = vld [vmem:[#allocation5] sm:$0xf]
    %v190 = vld [vmem:[#allocation5 + $0x4] sm:$0xf]
    %v191 = vld [vmem:[#allocation8] sm:$0xf]
    %v192 = vld [vmem:[#allocation8 + $0x4] sm:$0xf]
    %v193 = vld [vmem:[#allocation8 + $0x8] sm:$0xf]
    %v194 = vld [vmem:[#allocation8 + $0xc] sm:$0xf]
    %v195 = vld [vmem:[#allocation8 + $0x10] sm:$0xf]
    %v196 = vld [vmem:[#allocation8 + $0x14] sm:$0xf]
    %v197 = vld [vmem:[#allocation8 + $0x18] sm:$0xf]
    %v198 = vld [vmem:[#allocation8 + $0x1c] sm:$0xf]
    %v199 = vld [vmem:[#allocation8 + $0x20] sm:$0xf]
    %v200 = vld [vmem:[#allocation8 + $0x24] sm:$0xf]
    %v201 = vld [vmem:[#allocation8 + $0x28] sm:$0xf]
    %v202 = vld [vmem:[#allocation8 + $0x2c] sm:$0xf]
    %v203 = vld [vmem:[#allocation8 + $0x30] sm:$0xf]
    %v204 = vld [vmem:[#allocation8 + $0x34] sm:$0xf]
    %v205 = vld [vmem:[#allocation8 + $0x38] sm:$0xf]
    %v206 = vld [vmem:[#allocation8 + $0x3c] sm:$0xf]
    %v209 = vunpack.c.l.b16 %v189
    %v210 = vunpack.c.l.b16 %v190
    %v211 = vpack.c.b16 %v210, %v209
    %v229 = vunpack.c.l.b16 %v191
    %v230 = vunpack.c.l.b16 %v192
    %v231 = vunpack.c.l.b16 %v193
    %v232 = vunpack.c.l.b16 %v194
    %v233 = vunpack.c.l.b16 %v195
    %v234 = vunpack.c.l.b16 %v196
    %v235 = vunpack.c.l.b16 %v197
    %v236 = vunpack.c.l.b16 %v198
    %v237 = vunpack.c.l.b16 %v199
    %v238 = vunpack.c.l.b16 %v200
    %v239 = vunpack.c.l.b16 %v201
    %v240 = vunpack.c.l.b16 %v202
    %v241 = vunpack.c.l.b16 %v203
    %v242 = vunpack.c.l.b16 %v204
    %v243 = vunpack.c.l.b16 %v205
    %v244 = vunpack.c.l.b16 %v206
    %v245 = vpack.c.b16 %v230, %v229
    %v246 = vpack.c.b16 %v232, %v231
    %v247 = vpack.c.b16 %v234, %v233
    %v248 = vpack.c.b16 %v236, %v235
    %v249 = vpack.c.b16 %v238, %v237
    %v250 = vpack.c.b16 %v240, %v239
    %v251 = vpack.c.b16 %v242, %v241
    %v252 = vpack.c.b16 %v244, %v243
    %261 = vmatprep.subr.bf16.mxu0 0
    %262 = vmatpush1.bf16.msra.mxu0 %v245
    %263 = vmatprep.subr.bf16.mxu0 0
    %264 = vmatpush1.bf16.msra.mxu0 %v246
    %265 = vmatprep.subr.bf16.mxu0 0
    %266 = vmatpush1.bf16.msra.mxu0 %v247
    %267 = vmatprep.subr.bf16.mxu0 0
    %268 = vmatpush1.bf16.msra.mxu0 %v248
    %269 = vmatprep.subr.bf16.mxu0 0
    %270 = vmatpush1.bf16.msra.mxu0 %v249
    %271 = vmatprep.subr.bf16.mxu0 0
    %272 = vmatpush1.bf16.msra.mxu0 %v250
    %273 = vmatprep.subr.bf16.mxu0 0
    %274 = vmatpush1.bf16.msra.mxu0 %v251
    %275 = vmatprep.subr.bf16.mxu0 0
    %276 = vmatpush1.bf16.msra.mxu0 %v252
    %277 = vmatprep.subr.bf16.mxu0 0
    %278 = vmatpush1.bf16.msra.mxu0 0
    %279 = vmatprep.subr.bf16.mxu0 0
    %280 = vmatpush1.bf16.msra.mxu0 0
    %281 = vmatprep.subr.bf16.mxu0 0
    %282 = vmatpush1.bf16.msra.mxu0 0
    %283 = vmatprep.subr.bf16.mxu0 0
    %284 = vmatpush1.bf16.msra.mxu0 0
    %285 = vmatprep.subr.bf16.mxu0 0
    %286 = vmatpush1.bf16.msra.mxu0 0
    %287 = vmatprep.subr.bf16.mxu0 0
    %288 = vmatpush1.bf16.msra.mxu0 0
    %289 = vmatprep.subr.bf16.mxu0 0
    %290 = vmatpush1.bf16.msra.mxu0 0
    %291 = vmatprep.subr.bf16.mxu0 0
    %292 = vmatpush1.bf16.msra.mxu0 0
    %293 = vmatprep.mubr.bf16.mxu0 0
    %294 = vmatmul.mubr.bf16.gmra.mrb[0].mxu0 %v211
    %v295 = vpop.f32.mrb[0].mxu0
    %v296 = vadd.f32 0.0, %v295
    %v297 = vpop.f32.mrb[0].mxu0
    %v298 = vpop.f32.mrb[0].mxu0
    %v299 = vadd.f32 0.0, %v298
    %v300 = vpop.f32.mrb[0].mxu0
    %301 = vdwg.mxu0
    %v302 = vmul.f32 %v187, %v296
    %v303 = vmul.f32 %v188, %v299
    %304 = vst [vmem:[#allocation10] sm:$0xff] %v302
    %305 = vst [vmem:[#allocation10 + $0x8] sm:$0xff] %v303
    // Predicated region
    $region34: #{tpu_custom_call.1} parent=1 // pred_check
      _
    $region35: #{tpu_custom_call.1} parent=1 // pred_check_branch
      %307 = sbr.rel (0) target = $region37
    $region36: #{tpu_custom_call.1} parent=1 // pred_region
      %s309 = ssub.s32 256, 256
      %310 = vsyncadd [#allocation4], %s309
      %s311 = sshll.u32 [#allocation10], 4
      %s312 = int_to_ptr.vmem [resolvable:$true] %s311
      %317 = dma.vmem_to_hbm [thread:$0]  %s312, 256, %s4, [#allocation4], 128, 128, 8
    $region37: #{tpu_custom_call.1} parent=1 // pred_fallthru
      _
    // Predicated region
    $region38: #{tpu_custom_call.1} parent=1 // pred_check
      _
    $region39: #{tpu_custom_call.1} parent=1 // pred_check_branch
      %319 = sbr.rel (0) target = $region41
    $region40: #{tpu_custom_call.1} parent=1 // pred_region
      %320 = dma.done [#allocation4], 256
    $region41: #{tpu_custom_call.1} parent=1 // pred_fallthru
      _
    %321 = vsyncpa [#allocation3], 1
    %322 = vsyncpa [#allocation6], 1
    %323 = vsyncpa [#allocation9], 1
    %324 = vsyncpa [#allocation4], 1

// kernel: tpu_custom_call.1
$region0: #{tpu_custom_call.1}
  #allocation0 [shape = 'u32[]', space=smem, size = 0x4, offset = 0x4, fixed_abs, tag = 'smem constant byte address 0x4 - core index']
  #allocation1 [shape = 'u32[144,128]{1,0:T(1,128)}', space=vmem, size = 0x12000, scoped, tag = 'internal scratch']
  %s0 = inlined_call_operand.hbm [shape: bf16[16,128], index: 0, kind: input, shape index: {}]
  %s1 = inlined_call_operand.hbm [shape: bf16[16,128], index: 1, kind: input, shape index: {}]
  %s2 = inlined_call_operand.hbm [shape: bf16[128,128], index: 2, kind: input, shape index: {}]
  %s3 = inlined_call_operand.hbm [shape: bf16[128,128], index: 3, kind: input, shape index: {}]
  %s4 = inlined_call_operand.hbm [shape: f32[16,128], index: 4, kind: output, shape index: {}]
  %s5 = sld [smem:[#allocation0]]
  $region42: #{tpu_custom_call.1} parent=0
    _
  %s7 = ssub.s32 1, %s5
  %s8 = scalar_select 0, %s7, %s5
  $region1: #{tpu_custom_call.1} parent=0
    #allocation2 [shape = 'u8[4096]{0}', space=vmem, size = 0x1000, scoped, tag = 'input window, operand 0, single buffered']
    #allocation3 [shape = 's32[1]{0}', space=sflag, size = 0x4, scoped, tag = 'scoped memory for tpu_custom_call.1']
    #allocation4 [shape = 's32[1]{0}', space=sflag, size = 0x4, scoped, tag = 'scoped memory for tpu_custom_call.1']
    #allocation5 [shape = 'u8[4096]{0}', space=vmem, size = 0x1000, scoped, tag = 'input window, operand 1, single buffered']
    #allocation6 [shape = 's32[1]{0}', space=sflag, size = 0x4, scoped, tag = 'scoped memory for tpu_custom_call.1']
    #allocation7 [shape = 'u8[32768]{0}', space=vmem, size = 0x8000, scoped, tag = 'input window, operand 2, single buffered']
    #allocation8 [shape = 'u8[32768]{0}', space=vmem, size = 0x8000, scoped, tag = 'input window, operand 3, single buffered']
    #allocation9 [shape = 's32[1]{0}', space=sflag, size = 0x4, scoped, tag = 'scoped memory for tpu_custom_call.1']
    #allocation10 [shape = 'u8[8192]{0}', space=vmem, size = 0x2000, scoped, tag = 'output window, operand 0, single buffered']
    %9 = vsyncpa [#allocation3], 0
    %10 = vsyncpa [#allocation6], 0
    %11 = vsyncpa [#allocation9], 0
    %12 = vsyncpa [#allocation4], 0
    // Predicated region
    $region2: #{tpu_custom_call.1} parent=1 // pred_check
      _
    $region3: #{tpu_custom_call.1} parent=1 // pred_check_branch
      %14 = sbr.rel (0) target = $region5
    $region4: #{tpu_custom_call.1} parent=1 // pred_region
      %s16 = ssub.s32 128, 128
      %17 = vsyncadd [#allocation3], %s16
      %s18 = sshll.u32 [#allocation2], 4
      %s19 = int_to_ptr.vmem [resolvable:$true] %s18
      %24 = dma.hbm_to_vmem [thread:$0]  %s0, 128, %s19, [#allocation3], 64, 64, 4
    $region5: #{tpu_custom_call.1} parent=1 // pred_fallthru
      _
    // Predicated region
    $region6: #{tpu_custom_call.1} parent=1 // pred_check
      _
    $region7: #{tpu_custom_call.1} parent=1 // pred_check_branch
      %26 = sbr.rel (0) target = $region9
    $region8: #{tpu_custom_call.1} parent=1 // pred_region
      %s28 = ssub.s32 128, 128
      %29 = vsyncadd [#allocation6], %s28
      %s30 = sshll.u32 [#allocation5], 4
      %s31 = int_to_ptr.vmem [resolvable:$true] %s30
      %36 = dma.hbm_to_vmem [thread:$0]  %s1, 128, %s31, [#allocation6], 64, 64, 4
    $region9: #{tpu_custom_call.1} parent=1 // pred_fallthru
      _
    // Predicated region
    $region10: #{tpu_custom_call.1} parent=1 // pred_check
      _
    $region11: #{tpu_custom_call.1} parent=1 // pred_check_branch
      %38 = sbr.rel (0) target = $region13
    $region12: #{tpu_custom_call.1} parent=1 // pred_region
      %s40 = ssub.s32 1024, 1024
      %41 = vsyncadd [#allocation6], %s40
      %s42 = sshll.u32 [#allocation7], 4
      %s43 = int_to_ptr.vmem [resolvable:$true] %s42
      %48 = dma.hbm_to_vmem [thread:$0]  %s2, 1024, %s43, [#allocation6], 64, 64, 4
    $region13: #{tpu_custom_call.1} parent=1 // pred_fallthru
      _
    // Predicated region
    $region14: #{tpu_custom_call.1} parent=1 // pred_check
      _
    $region15: #{tpu_custom_call.1} parent=1 // pred_check_branch
      %50 = sbr.rel (0) target = $region17
    $region16: #{tpu_custom_call.1} parent=1 // pred_region
      %s52 = ssub.s32 1024, 1024
      %53 = vsyncadd [#allocation9], %s52
      %s54 = sshll.u32 [#allocation8], 4
      %s55 = int_to_ptr.vmem [resolvable:$true] %s54
      %60 = dma.hbm_to_vmem [thread:$0]  %s3, 1024, %s55, [#allocation9], 64, 64, 4
    $region17: #{tpu_custom_call.1} parent=1 // pred_fallthru
      _
    // Predicated region
    $region18: #{tpu_custom_call.1} parent=1 // pred_check
      _
    $region19: #{tpu_custom_call.1} parent=1 // pred_check_branch
      %62 = sbr.rel (0) target = $region21
    $region20: #{tpu_custom_call.1} parent=1 // pred_region
      %63 = dma.done [#allocation3], 128
    $region21: #{tpu_custom_call.1} parent=1 // pred_fallthru
      _
    // Predicated region
    $region22: #{tpu_custom_call.1} parent=1 // pred_check
      _
    $region23: #{tpu_custom_call.1} parent=1 // pred_check_branch
      %65 = sbr.rel (0) target = $region25
    $region24: #{tpu_custom_call.1} parent=1 // pred_region
      %66 = dma.done [#allocation6], 128
    $region25: #{tpu_custom_call.1} parent=1 // pred_fallthru
      _
    // Predicated region
    $region26: #{tpu_custom_call.1} parent=1 // pred_check
      _
    $region27: #{tpu_custom_call.1} parent=1 // pred_check_branch
      %68 = sbr.rel (0) target = $region29
    $region28: #{tpu_custom_call.1} parent=1 // pred_region
      %69 = dma.done [#allocation6], 1024
    $region29: #{tpu_custom_call.1} parent=1 // pred_fallthru
      _
    // Predicated region
    $region30: #{tpu_custom_call.1} parent=1 // pred_check
      _
    $region31: #{tpu_custom_call.1} parent=1 // pred_check_branch
      %71 = sbr.rel (0) target = $region33
    $region32: #{tpu_custom_call.1} parent=1 // pred_region
      %72 = dma.done [#allocation9], 1024
    $region33: #{tpu_custom_call.1} parent=1 // pred_fallthru
      _
    %v74 = vld [vmem:[#allocation2] sm:$0xf]
    %v75 = vld [vmem:[#allocation2 + $0x4] sm:$0xf]
    %v76 = vld [vmem:[#allocation7] sm:$0xf]
    %v77 = vld [vmem:[#allocation7 + $0x4] sm:$0xf]
    %v78 = vld [vmem:[#allocation7 + $0x8] sm:$0xf]
    %v79 = vld [vmem:[#allocation7 + $0xc] sm:$0xf]
    %v80 = vld [vmem:[#allocation7 + $0x10] sm:$0xf]
    %v81 = vld [vmem:[#allocation7 + $0x14] sm:$0xf]
    %v82 = vld [vmem:[#allocation7 + $0x18] sm:$0xf]
    %v83 = vld [vmem:[#allocation7 + $0x1c] sm:$0xf]
    %v84 = vld [vmem:[#allocation7 + $0x20] sm:$0xf]
    %v85 = vld [vmem:[#allocation7 + $0x24] sm:$0xf]
    %v86 = vld [vmem:[#allocation7 + $0x28] sm:$0xf]
    %v87 = vld [vmem:[#allocation7 + $0x2c] sm:$0xf]
    %v88 = vld [vmem:[#allocation7 + $0x30] sm:$0xf]
    %v89 = vld [vmem:[#allocation7 + $0x34] sm:$0xf]
    %v90 = vld [vmem:[#allocation7 + $0x38] sm:$0xf]
    %v91 = vld [vmem:[#allocation7 + $0x3c] sm:$0xf]
    %v94 = vunpack.c.l.b16 %v74
    %v95 = vunpack.c.l.b16 %v75
    %v96 = vpack.c.b16 %v95, %v94
    %v114 = vunpack.c.l.b16 %v76
    %v115 = vunpack.c.l.b16 %v77
    %v116 = vunpack.c.l.b16 %v78
    %v117 = vunpack.c.l.b16 %v79
    %v118 = vunpack.c.l.b16 %v80
    %v119 = vunpack.c.l.b16 %v81
    %v120 = vunpack.c.l.b16 %v82
    %v121 = vunpack.c.l.b16 %v83
    %v122 = vunpack.c.l.b16 %v84
    %v123 = vunpack.c.l.b16 %v85
    %v124 = vunpack.c.l.b16 %v86
    %v125 = vunpack.c.l.b16 %v87
    %v126 = vunpack.c.l.b16 %v88
    %v127 = vunpack.c.l.b16 %v89
    %v128 = vunpack.c.l.b16 %v90
    %v129 = vunpack.c.l.b16 %v91
    %v130 = vpack.c.b16 %v115, %v114
    %v131 = vpack.c.b16 %v117, %v116
    %v132 = vpack.c.b16 %v119, %v118
    %v133 = vpack.c.b16 %v121, %v120
    %v134 = vpack.c.b16 %v123, %v122
    %v135 = vpack.c.b16 %v125, %v124
    %v136 = vpack.c.b16 %v127, %v126
    %v137 = vpack.c.b16 %v129, %v128
    %146 = vmatprep.subr.bf16.mxu0 0
    %147 = vmatpush1.bf16.msra.mxu0 %v130
    %148 = vmatprep.subr.bf16.mxu0 0
    %149 = vmatpush1.bf16.msra.mxu0 %v131
    %150 = vmatprep.subr.bf16.mxu0 0
    %151 = vmatpush1.bf16.msra.mxu0 %v132
    %152 = vmatprep.subr.bf16.mxu0 0
    %153 = vmatpush1.bf16.msra.mxu0 %v133
    %154 = vmatprep.subr.bf16.mxu0 0
    %155 = vmatpush1.bf16.msra.mxu0 %v134
    %156 = vmatprep.subr.bf16.mxu0 0
    %157 = vmatpush1.bf16.msra.mxu0 %v135
    %158 = vmatprep.subr.bf16.mxu0 0
    %159 = vmatpush1.bf16.msra.mxu0 %v136
    %160 = vmatprep.subr.bf16.mxu0 0
    %161 = vmatpush1.bf16.msra.mxu0 %v137
    %162 = vmatprep.subr.bf16.mxu0 0
    %163 = vmatpush1.bf16.msra.mxu0 0
    %164 = vmatprep.subr.bf16.mxu0 0
    %165 = vmatpush1.bf16.msra.mxu0 0
    %166 = vmatprep.subr.bf16.mxu0 0
    %167 = vmatpush1.bf16.msra.mxu0 0
    %168 = vmatprep.subr.bf16.mxu0 0
    %169 = vmatpush1.bf16.msra.mxu0 0
    %170 = vmatprep.subr.bf16.mxu0 0
    %171 = vmatpush1.bf16.msra.mxu0 0
    %172 = vmatprep.subr.bf16.mxu0 0
    %173 = vmatpush1.bf16.msra.mxu0 0
    %174 = vmatprep.subr.bf16.mxu0 0
    %175 = vmatpush1.bf16.msra.mxu0 0
    %176 = vmatprep.subr.bf16.mxu0 0
    %177 = vmatpush1.bf16.msra.mxu0 0
    %178 = vmatprep.mubr.bf16.mxu0 0
    %179 = vmatmul.mubr.bf16.gmra.mrb[0].mxu0 %v96
    %v180 = vpop.f32.mrb[0].mxu0
    %v181 = vadd.f32 0.0, %v180
    %v182 = vpop.f32.mrb[0].mxu0
    %v183 = vpop.f32.mrb[0].mxu0
    %v184 = vadd.f32 0.0, %v183
    %v185 = vpop.f32.mrb[0].mxu0
    %186 = vdwg.mxu0
    %v187 = vmul.f32 %v181, 0.125
    %v188 = vmul.f32 %v184, 0.125
    %v189 = vld [vmem:[#allocation5] sm:$0xf]
    %v190 = vld [vmem:[#allocation5 + $0x4] sm:$0xf]
    %v191 = vld [vmem:[#allocation8] sm:$0xf]
    %v192 = vld [vmem:[#allocation8 + $0x4] sm:$0xf]
    %v193 = vld [vmem:[#allocation8 + $0x8] sm:$0xf]
    %v194 = vld [vmem:[#allocation8 + $0xc] sm:$0xf]
    %v195 = vld [vmem:[#allocation8 + $0x10] sm:$0xf]
    %v196 = vld [vmem:[#allocation8 + $0x14] sm:$0xf]
    %v197 = vld [vmem:[#allocation8 + $0x18] sm:$0xf]
    %v198 = vld [vmem:[#allocation8 + $0x1c] sm:$0xf]
    %v199 = vld [vmem:[#allocation8 + $0x20] sm:$0xf]
    %v200 = vld [vmem:[#allocation8 + $0x24] sm:$0xf]
    %v201 = vld [vmem:[#allocation8 + $0x28] sm:$0xf]
    %v202 = vld [vmem:[#allocation8 + $0x2c] sm:$0xf]
    %v203 = vld [vmem:[#allocation8 + $0x30] sm:$0xf]
    %v204 = vld [vmem:[#allocation8 + $0x34] sm:$0xf]
    %v205 = vld [vmem:[#allocation8 + $0x38] sm:$0xf]
    %v206 = vld [vmem:[#allocation8 + $0x3c] sm:$0xf]
    %v209 = vunpack.c.l.b16 %v189
    %v210 = vunpack.c.l.b16 %v190
    %v211 = vpack.c.b16 %v210, %v209
    %v229 = vunpack.c.l.b16 %v191
    %v230 = vunpack.c.l.b16 %v192
    %v231 = vunpack.c.l.b16 %v193
    %v232 = vunpack.c.l.b16 %v194
    %v233 = vunpack.c.l.b16 %v195
    %v234 = vunpack.c.l.b16 %v196
    %v235 = vunpack.c.l.b16 %v197
    %v236 = vunpack.c.l.b16 %v198
    %v237 = vunpack.c.l.b16 %v199
    %v238 = vunpack.c.l.b16 %v200
    %v239 = vunpack.c.l.b16 %v201
    %v240 = vunpack.c.l.b16 %v202
    %v241 = vunpack.c.l.b16 %v203
    %v242 = vunpack.c.l.b16 %v204
    %v243 = vunpack.c.l.b16 %v205
    %v244 = vunpack.c.l.b16 %v206
    %v245 = vpack.c.b16 %v230, %v229
    %v246 = vpack.c.b16 %v232, %v231
    %v247 = vpack.c.b16 %v234, %v233
    %v248 = vpack.c.b16 %v236, %v235
    %v249 = vpack.c.b16 %v238, %v237
    %v250 = vpack.c.b16 %v240, %v239
    %v251 = vpack.c.b16 %v242, %v241
    %v252 = vpack.c.b16 %v244, %v243
    %261 = vmatprep.subr.bf16.mxu0 0
    %262 = vmatpush1.bf16.msra.mxu0 %v245
    %263 = vmatprep.subr.bf16.mxu0 0
    %264 = vmatpush1.bf16.msra.mxu0 %v246
    %265 = vmatprep.subr.bf16.mxu0 0
    %266 = vmatpush1.bf16.msra.mxu0 %v247
    %267 = vmatprep.subr.bf16.mxu0 0
    %268 = vmatpush1.bf16.msra.mxu0 %v248
    %269 = vmatprep.subr.bf16.mxu0 0
    %270 = vmatpush1.bf16.msra.mxu0 %v249
    %271 = vmatprep.subr.bf16.mxu0 0
    %272 = vmatpush1.bf16.msra.mxu0 %v250
    %273 = vmatprep.subr.bf16.mxu0 0
    %274 = vmatpush1.bf16.msra.mxu0 %v251
    %275 = vmatprep.subr.bf16.mxu0 0
    %276 = vmatpush1.bf16.msra.mxu0 %v252
    %277 = vmatprep.subr.bf16.mxu0 0
    %278 = vmatpush1.bf16.msra.mxu0 0
    %279 = vmatprep.subr.bf16.mxu0 0
    %280 = vmatpush1.bf16.msra.mxu0 0
    %281 = vmatprep.subr.bf16.mxu0 0
    %282 = vmatpush1.bf16.msra.mxu0 0
    %283 = vmatprep.subr.bf16.mxu0 0
    %284 = vmatpush1.bf16.msra.mxu0 0
    %285 = vmatprep.subr.bf16.mxu0 0
    %286 = vmatpush1.bf16.msra.mxu0 0
    %287 = vmatprep.subr.bf16.mxu0 0
    %288 = vmatpush1.bf16.msra.mxu0 0
    %289 = vmatprep.subr.bf16.mxu0 0
    %290 = vmatpush1.bf16.msra.mxu0 0
    %291 = vmatprep.subr.bf16.mxu0 0
    %292 = vmatpush1.bf16.msra.mxu0 0
    %293 = vmatprep.mubr.bf16.mxu0 0
    %294 = vmatmul.mubr.bf16.gmra.mrb[0].mxu0 %v211
    %v295 = vpop.f32.mrb[0].mxu0
    %v296 = vadd.f32 0.0, %v295
    %v297 = vpop.f32.mrb[0].mxu0
    %v298 = vpop.f32.mrb[0].mxu0
    %v299 = vadd.f32 0.0, %v298
    %v300 = vpop.f32.mrb[0].mxu0
    %301 = vdwg.mxu0
    %v302 = vmul.f32 %v187, %v296
    %v303 = vmul.f32 %v188, %v299
    %304 = vst [vmem:[#allocation10] sm:$0xff] %v302
    %305 = vst [vmem:[#allocation10 + $0x8] sm:$0xff] %v303
    // Predicated region
    $region34: #{tpu_custom_call.1} parent=1 // pred_check
      _
    $region35: #{tpu_custom_call.1} parent=1 // pred_check_branch
      %307 = sbr.rel (0) target = $region37
    $region36: #{tpu_custom_call.1} parent=1 // pred_region
      %s309 = ssub.s32 256, 256
      %310 = vsyncadd [#allocation4], %s309
      %s311 = sshll.u32 [#allocation10], 4
      %s312 = int_to_ptr.vmem [resolvable:$true] %s311
      %317 = dma.vmem_to_hbm [thread:$0]  %s312, 256, %s4, [#allocation4], 128, 128, 8
    $region37: #{tpu_custom_call.1} parent=1 // pred_fallthru
      _
    // Predicated region
    $region38: #{tpu_custom_call.1} parent=1 // pred_check
      _
    $region39: #{tpu_custom_call.1} parent=1 // pred_check_branch
      %319 = sbr.rel (0) target = $region41
    $region40: #{tpu_custom_call.1} parent=1 // pred_region
      %320 = dma.done [#allocation4], 256
    $region41: #{tpu_custom_call.1} parent=1 // pred_fallthru
      _
    %321 = vsyncpa [#allocation3], 1
    %322 = vsyncpa [#allocation6], 1
    %323 = vsyncpa [#allocation9], 1
    %324 = vsyncpa [#allocation4], 1

</llo_original>
